<compile_context>
chip_gen: v5e
topology: v5e:2x2
jax: 0.10.0
libtpu: 0.0.40
codegen_flags: <defaults>
</compile_context>

<pallas_src>
import jax
import jax.numpy as jnp
from jax import lax
from jax.experimental import pallas as pl
from jax.experimental.pallas import tpu as pltpu


def fused_residual_block_kernel(x_ref, t1_ref, t2_ref, p_ref, o_ref):
    """out = BN2(conv2(PReLU(BN1(conv1(x))))) + x, fully fused, no scratch.

    x_ref  : (H, L)        packed activations, L = N*W*C (lane axis, 128 here)
    t1_ref : (3, L, L)     conv1 banded block-diagonal weights (BN1 scale folded)
    t2_ref : (3, L, L)     conv2 banded block-diagonal weights (BN2 scale folded)
    p_ref  : (3, L)        rows = [bias1, prelu_alpha1, bias2]
    o_ref  : (H, L)        output
    """
    H, L = x_ref.shape

    x = x_ref[...].astype(jnp.float32)          # (H, L)

    b1 = p_ref[0:1, :]
    a1 = p_ref[1:2, :]
    b2 = p_ref[2:3, :]

    # Row index mask for the H-direction zero padding of the +/-1 row taps.
    row = lax.broadcasted_iota(jnp.int32, (H, L), 0)
    not_first = row > 0
    not_last = row < H - 1

    def conv3x3(v, t_ref):
        # Row taps via XLU rotate + mask (keeps operands in vregs, no scratch).
        up = jnp.where(not_first, pltpu.roll(v, shift=1, axis=0), 0.0)      # row y-1
        dn = jnp.where(not_last, pltpu.roll(v, shift=H - 1, axis=0), 0.0)   # row y+1
        acc = jnp.dot(up, t_ref[0], preferred_element_type=jnp.float32)
        acc = acc + jnp.dot(v, t_ref[1], preferred_element_type=jnp.float32)
        acc = acc + jnp.dot(dn, t_ref[2], preferred_element_type=jnp.float32)
        return acc

    # block1: conv (BN scale folded into weights) -> +bias -> PReLU
    h = conv3x3(x, t1_ref) + b1
    h = jnp.where(h >= 0.0, h, a1 * h)

    # block2: conv -> +bias, then the residual add (x still resident in vregs).
    y = conv3x3(h, t2_ref) + b2 + x
    o_ref[...] = y.astype(o_ref.dtype)


def _banded_weights(w_hwio, scale, width, n_pack):
    """(3,3,C,Co) HWIO conv weights -> (3, n*W*C, n*W*Co) banded block-diag mats.

    Per dy tap:  T[p*C+ci, q*Co+co] = scale[co] * w[dy, dx, ci, co] with
    dx = p - q + 1 when 0 <= dx < 3, else 0 (width-direction sliding window
    with SAME zero padding folded in).  The matrix is then replicated
    block-diagonally n_pack times so n_pack batch images packed side-by-side
    along the lane axis do not mix.
    """
    kh, kw, cin, cout = w_hwio.shape
    w = w_hwio * scale[None, None, None, :]                       # fold BN scale
    p = jnp.arange(width)[None, :, None]
    q = jnp.arange(width)[None, None, :]
    dx = jnp.arange(kw)[:, None, None]
    ind = (p == q + dx - 1).astype(w.dtype)                       # (kw, W, W)
    t6 = (ind[None, :, :, None, :, None] *
          w[:, :, None, :, None, :]).sum(axis=1)                  # (kh,W,C,W,Co)
    t = t6.reshape(kh, width * cin, width * cout)                 # (kh, WC, WCo)
    eye = jnp.eye(n_pack, dtype=w.dtype)
    tb = jnp.einsum("ab,kij->kaibj", eye, t)
    return tb.reshape(kh, n_pack * width * cin, n_pack * width * cout)


def precompute_kernel_params(params, *, width, n_pack):
    """One-time host-side precompute (off the per-call hot path)."""
    reps = n_pack * width
    t1 = _banded_weights(params["w1"], params["s1"], width, n_pack)
    t2 = _banded_weights(params["w2"], params["s2"], width, n_pack)
    pvec = jnp.stack([jnp.tile(params["b1"], reps),
                      jnp.tile(params["a1"], reps),
                      jnp.tile(params["b2"], reps)]).astype(jnp.float32)
    return dict(t1=t1.astype(jnp.float32), t2=t2.astype(jnp.float32), p=pvec)


@jax.jit
def residual_block(x_nchw, kparams):
    """Forward pass of ResidualBlock (eval-mode BN). NCHW in / NCHW out."""
    N, C, H, W = x_nchw.shape
    L = N * W * C

    # NCHW -> (H, N*W*C): batch, width and channels packed into the lane axis.
    x = jnp.transpose(x_nchw, (2, 0, 3, 1)).reshape(H, L)

    out = pl.pallas_call(
        fused_residual_block_kernel,
        out_shape=jax.ShapeDtypeStruct((H, L), x_nchw.dtype),
        grid_spec=pltpu.PrefetchScalarGridSpec(
            num_scalar_prefetch=0,
            grid=(1,),                                            # single step
            in_specs=[
                pl.BlockSpec((H, L), lambda n: (0, 0)),           # activations
                pl.BlockSpec((3, L, L), lambda n: (0, 0, 0)),     # conv1 weights
                pl.BlockSpec((3, L, L), lambda n: (0, 0, 0)),     # conv2 weights
                pl.BlockSpec((3, L), lambda n: (0, 0)),           # bias/alpha
            ],
            out_specs=pl.BlockSpec((H, L), lambda n: (0, 0)),
        ),
        compiler_params=pltpu.CompilerParams(
            dimension_semantics=("arbitrary",),
            vmem_limit_bytes=32 * 1024 * 1024,    # safe on v5e/v6e/v7x
        ),
    )(x, kparams["t1"], kparams["t2"], kparams["p"])

    # (H, N*W*C) -> NCHW
    return jnp.transpose(out.reshape(H, N, W, C), (1, 3, 0, 2))


def _make_params(key, C):
    """Deterministic synthetic parameters (BatchNorm folded to scale/bias)."""
    ks = jax.random.split(key, 4)
    eps = 1e-5

    def bn_fold(k):
        k0, k1, k2, k3 = jax.random.split(k, 4)
        gamma = 1.0 + 0.1 * jax.random.normal(k0, (C,), jnp.float32)
        beta = 0.1 * jax.random.normal(k1, (C,), jnp.float32)
        mean = 0.1 * jax.random.normal(k2, (C,), jnp.float32)
        var = jnp.abs(1.0 + 0.1 * jax.random.normal(k3, (C,), jnp.float32))
        scale = gamma / jnp.sqrt(var + eps)
        return scale, beta - mean * scale

    w1 = 0.1 * jax.random.normal(ks[0], (3, 3, C, C), jnp.float32)  # HWIO
    w2 = 0.1 * jax.random.normal(ks[1], (3, 3, C, C), jnp.float32)
    s1, b1 = bn_fold(ks[2])
    s2, b2 = bn_fold(ks[3])
    a1 = 0.25 * jnp.ones((C,), jnp.float32)   # PReLU default init = 0.25
    return dict(w1=w1, s1=s1, b1=b1, a1=a1, w2=w2, s2=s2, b2=b2)


def _reference(x_nchw, p):
    """Pure-JAX reference of the same forward pass (for validation)."""
    x = jnp.transpose(x_nchw, (0, 2, 3, 1))
    dn = ("NHWC", "HWIO", "NHWC")

    def conv(v, w):
        return lax.conv_general_dilated(v, w, (1, 1), "SAME",
                                        dimension_numbers=dn)

    h = conv(x, p["w1"]) * p["s1"] + p["b1"]
    h = jnp.where(h >= 0, h, p["a1"] * h)
    h = conv(h, p["w2"]) * p["s2"] + p["b2"]
    return jnp.transpose(h + x, (0, 3, 1, 2))


if __name__ == "__main__":
    key = jax.random.PRNGKey(0)
    k_x, k_p = jax.random.split(key)

    N, C, H, W = 2, 4, 16, 16
    x = jax.random.normal(k_x, (N, C, H, W), jnp.float32)
    params = _make_params(k_p, C)

    # One-time precompute (per set of weights), off the per-call hot path.
    kparams = precompute_kernel_params(params, width=W, n_pack=N)

    out = jax.block_until_ready(residual_block(x, kparams))
    ref = _reference(x, params)

    assert out.shape == (N, C, H, W)
    max_err = float(jnp.max(jnp.abs(out - ref)))
    assert max_err < 1e-3, f"max abs err {max_err}"

    print("KERNEL_OK")
</pallas_src>

<mosaic_0001>
module attributes {stable_mosaic.version = 11 : i64} {
  func.func @fused_residual_block_kernel(%arg0: i32, %arg1: memref<16x128xf32, #tpu.memory_space<vmem>>, %arg2: memref<3x128x128xf32, #tpu.memory_space<vmem>>, %arg3: memref<3x128x128xf32, #tpu.memory_space<vmem>>, %arg4: memref<3x128xf32, #tpu.memory_space<vmem>>, %arg5: memref<16x128xf32, #tpu.memory_space<vmem>>) attributes {dimension_semantics = [#tpu.dimension_semantics<arbitrary>], iteration_bounds = array<i64: 1>, scalar_prefetch = 0 : i64, scratch_operands = 0 : i64, tpu.core_type = #tpu.core_type<tc>, window_params = [{pipeline_mode = #tpu.pipeline_mode<synchronous>, transform_indices = @transform_0, window_bounds = array<i64: 16, 128>}, {pipeline_mode = #tpu.pipeline_mode<synchronous>, transform_indices = @transform_1, window_bounds = array<i64: 3, 128, 128>}, {pipeline_mode = #tpu.pipeline_mode<synchronous>, transform_indices = @transform_2, window_bounds = array<i64: 3, 128, 128>}, {pipeline_mode = #tpu.pipeline_mode<synchronous>, transform_indices = @transform_3, window_bounds = array<i64: 3, 128>}, {pipeline_mode = #tpu.pipeline_mode<synchronous>, transform_indices = @transform_4, window_bounds = array<i64: 16, 128>}]} {
    %c0 = arith.constant 0 : index
    %c0_0 = arith.constant 0 : index
    %0 = vector.load %arg1[%c0, %c0_0] : memref<16x128xf32, #tpu.memory_space<vmem>>, vector<16x128xf32>
    %c0_1 = arith.constant 0 : index
    %c0_2 = arith.constant 0 : index
    %1 = vector.load %arg4[%c0_1, %c0_2] : memref<3x128xf32, #tpu.memory_space<vmem>>, vector<1x128xf32>
    %c1 = arith.constant 1 : index
    %c0_3 = arith.constant 0 : index
    %2 = vector.load %arg4[%c1, %c0_3] : memref<3x128xf32, #tpu.memory_space<vmem>>, vector<1x128xf32>
    %c2 = arith.constant 2 : index
    %c0_4 = arith.constant 0 : index
    %3 = vector.load %arg4[%c2, %c0_4] : memref<3x128xf32, #tpu.memory_space<vmem>>, vector<1x128xf32>
    %4 = tpu.iota {dimensions = array<i32: 0>} : vector<16x128xi32>
    %c0_i32 = arith.constant 0 : i32
    %5 = vector.broadcast %c0_i32 : i32 to vector<16x128xi32>
    %6 = arith.cmpi sgt, %4, %5 : vector<16x128xi32>
    %c15_i32 = arith.constant 15 : i32
    %7 = vector.broadcast %c15_i32 : i32 to vector<16x128xi32>
    %8 = arith.cmpi slt, %4, %7 : vector<16x128xi32>
    %c1_i32 = arith.constant 1 : i32
    %9 = tpu.dynamic_rotate %0 by %c1_i32 dim 0 : vector<16x128xf32>, i32 -> vector<16x128xf32>
    %cst = arith.constant 0.000000e+00 : f32
    %10 = vector.broadcast %cst : f32 to vector<16x128xf32>
    %11 = arith.select %6, %9, %10 : vector<16x128xi1>, vector<16x128xf32>
    %c15_i32_5 = arith.constant 15 : i32
    %12 = tpu.dynamic_rotate %0 by %c15_i32_5 dim 0 : vector<16x128xf32>, i32 -> vector<16x128xf32>
    %cst_6 = arith.constant 0.000000e+00 : f32
    %13 = vector.broadcast %cst_6 : f32 to vector<16x128xf32>
    %14 = arith.select %8, %12, %13 : vector<16x128xi1>, vector<16x128xf32>
    %c0_7 = arith.constant 0 : index
    %c0_8 = arith.constant 0 : index
    %c0_9 = arith.constant 0 : index
    %15 = vector.load %arg2[%c0_7, %c0_8, %c0_9] : memref<3x128x128xf32, #tpu.memory_space<vmem>>, vector<1x128x128xf32>
    %16 = vector.shape_cast %15 : vector<1x128x128xf32> to vector<128x128xf32>
    %cst_10 = arith.constant dense<0.000000e+00> : vector<16x128xf32>
    %17 = tpu.matmul %11, %16, %cst_10 {dimension_numbers = #tpu.dot_dimension_numbers<[1], [0], [0], [1], [0, 0, 1, 1], [], []>} : vector<16x128xf32>, vector<128x128xf32>, vector<16x128xf32> -> vector<16x128xf32>
    %c1_11 = arith.constant 1 : index
    %c0_12 = arith.constant 0 : index
    %c0_13 = arith.constant 0 : index
    %18 = vector.load %arg2[%c1_11, %c0_12, %c0_13] : memref<3x128x128xf32, #tpu.memory_space<vmem>>, vector<1x128x128xf32>
    %19 = vector.shape_cast %18 : vector<1x128x128xf32> to vector<128x128xf32>
    %cst_14 = arith.constant dense<0.000000e+00> : vector<16x128xf32>
    %20 = tpu.matmul %0, %19, %cst_14 {dimension_numbers = #tpu.dot_dimension_numbers<[1], [0], [0], [1], [0, 0, 1, 1], [], []>} : vector<16x128xf32>, vector<128x128xf32>, vector<16x128xf32> -> vector<16x128xf32>
    %21 = arith.addf %17, %20 : vector<16x128xf32>
    %c2_15 = arith.constant 2 : index
    %c0_16 = arith.constant 0 : index
    %c0_17 = arith.constant 0 : index
    %22 = vector.load %arg2[%c2_15, %c0_16, %c0_17] : memref<3x128x128xf32, #tpu.memory_space<vmem>>, vector<1x128x128xf32>
    %23 = vector.shape_cast %22 : vector<1x128x128xf32> to vector<128x128xf32>
    %cst_18 = arith.constant dense<0.000000e+00> : vector<16x128xf32>
    %24 = tpu.matmul %14, %23, %cst_18 {dimension_numbers = #tpu.dot_dimension_numbers<[1], [0], [0], [1], [0, 0, 1, 1], [], []>} : vector<16x128xf32>, vector<128x128xf32>, vector<16x128xf32> -> vector<16x128xf32>
    %25 = arith.addf %21, %24 : vector<16x128xf32>
    %26 = vector.broadcast %1 : vector<1x128xf32> to vector<16x128xf32>
    %27 = arith.addf %25, %26 : vector<16x128xf32>
    %cst_19 = arith.constant 0.000000e+00 : f32
    %28 = vector.broadcast %cst_19 : f32 to vector<16x128xf32>
    %29 = arith.cmpf oge, %27, %28 : vector<16x128xf32>
    %30 = vector.broadcast %2 : vector<1x128xf32> to vector<16x128xf32>
    %31 = arith.mulf %30, %27 : vector<16x128xf32>
    %32 = arith.select %29, %27, %31 : vector<16x128xi1>, vector<16x128xf32>
    %c1_i32_20 = arith.constant 1 : i32
    %33 = tpu.dynamic_rotate %32 by %c1_i32_20 dim 0 : vector<16x128xf32>, i32 -> vector<16x128xf32>
    %cst_21 = arith.constant 0.000000e+00 : f32
    %34 = vector.broadcast %cst_21 : f32 to vector<16x128xf32>
    %35 = arith.select %6, %33, %34 : vector<16x128xi1>, vector<16x128xf32>
    %c15_i32_22 = arith.constant 15 : i32
    %36 = tpu.dynamic_rotate %32 by %c15_i32_22 dim 0 : vector<16x128xf32>, i32 -> vector<16x128xf32>
    %cst_23 = arith.constant 0.000000e+00 : f32
    %37 = vector.broadcast %cst_23 : f32 to vector<16x128xf32>
    %38 = arith.select %8, %36, %37 : vector<16x128xi1>, vector<16x128xf32>
    %c0_24 = arith.constant 0 : index
    %c0_25 = arith.constant 0 : index
    %c0_26 = arith.constant 0 : index
    %39 = vector.load %arg3[%c0_24, %c0_25, %c0_26] : memref<3x128x128xf32, #tpu.memory_space<vmem>>, vector<1x128x128xf32>
    %40 = vector.shape_cast %39 : vector<1x128x128xf32> to vector<128x128xf32>
    %cst_27 = arith.constant dense<0.000000e+00> : vector<16x128xf32>
    %41 = tpu.matmul %35, %40, %cst_27 {dimension_numbers = #tpu.dot_dimension_numbers<[1], [0], [0], [1], [0, 0, 1, 1], [], []>} : vector<16x128xf32>, vector<128x128xf32>, vector<16x128xf32> -> vector<16x128xf32>
    %c1_28 = arith.constant 1 : index
    %c0_29 = arith.constant 0 : index
    %c0_30 = arith.constant 0 : index
    %42 = vector.load %arg3[%c1_28, %c0_29, %c0_30] : memref<3x128x128xf32, #tpu.memory_space<vmem>>, vector<1x128x128xf32>
    %43 = vector.shape_cast %42 : vector<1x128x128xf32> to vector<128x128xf32>
    %cst_31 = arith.constant dense<0.000000e+00> : vector<16x128xf32>
    %44 = tpu.matmul %32, %43, %cst_31 {dimension_numbers = #tpu.dot_dimension_numbers<[1], [0], [0], [1], [0, 0, 1, 1], [], []>} : vector<16x128xf32>, vector<128x128xf32>, vector<16x128xf32> -> vector<16x128xf32>
    %45 = arith.addf %41, %44 : vector<16x128xf32>
    %c2_32 = arith.constant 2 : index
    %c0_33 = arith.constant 0 : index
    %c0_34 = arith.constant 0 : index
    %46 = vector.load %arg3[%c2_32, %c0_33, %c0_34] : memref<3x128x128xf32, #tpu.memory_space<vmem>>, vector<1x128x128xf32>
    %47 = vector.shape_cast %46 : vector<1x128x128xf32> to vector<128x128xf32>
    %cst_35 = arith.constant dense<0.000000e+00> : vector<16x128xf32>
    %48 = tpu.matmul %38, %47, %cst_35 {dimension_numbers = #tpu.dot_dimension_numbers<[1], [0], [0], [1], [0, 0, 1, 1], [], []>} : vector<16x128xf32>, vector<128x128xf32>, vector<16x128xf32> -> vector<16x128xf32>
    %49 = arith.addf %45, %48 : vector<16x128xf32>
    %50 = vector.broadcast %3 : vector<1x128xf32> to vector<16x128xf32>
    %51 = arith.addf %49, %50 : vector<16x128xf32>
    %52 = arith.addf %51, %0 : vector<16x128xf32>
    %c0_36 = arith.constant 0 : index
    %c0_37 = arith.constant 0 : index
    %53 = vector.load %arg5[%c0_36, %c0_37] : memref<16x128xf32, #tpu.memory_space<vmem>>, vector<16x128xf32>
    tpu.vector_store %arg5[%c0_36, %c0_37], %52 {strides = array<i32>} : memref<16x128xf32, #tpu.memory_space<vmem>>, vector<16x128xf32>,
    return
  }
  func.func @transform_0(%arg0: i32) -> (i32, i32) {
    %c0_i32 = arith.constant 0 : i32
    %c0_i32_0 = arith.constant 0 : i32
    %c0_i32_1 = arith.constant 0 : i32
    return %c0_i32, %c0_i32_0 : i32, i32
  }
  func.func @transform_1(%arg0: i32) -> (i32, i32, i32) {
    %c0_i32 = arith.constant 0 : i32
    %c0_i32_0 = arith.constant 0 : i32
    %c0_i32_1 = arith.constant 0 : i32
    %c0_i32_2 = arith.constant 0 : i32
    return %c0_i32, %c0_i32_0, %c0_i32_1 : i32, i32, i32
  }
  func.func @transform_2(%arg0: i32) -> (i32, i32, i32) {
    %c0_i32 = arith.constant 0 : i32
    %c0_i32_0 = arith.constant 0 : i32
    %c0_i32_1 = arith.constant 0 : i32
    %c0_i32_2 = arith.constant 0 : i32
    return %c0_i32, %c0_i32_0, %c0_i32_1 : i32, i32, i32
  }
  func.func @transform_3(%arg0: i32) -> (i32, i32) {
    %c0_i32 = arith.constant 0 : i32
    %c0_i32_0 = arith.constant 0 : i32
    %c0_i32_1 = arith.constant 0 : i32
    return %c0_i32, %c0_i32_0 : i32, i32
  }
  func.func @transform_4(%arg0: i32) -> (i32, i32) {
    %c0_i32 = arith.constant 0 : i32
    %c0_i32_0 = arith.constant 0 : i32
    %c0_i32_1 = arith.constant 0 : i32
    return %c0_i32, %c0_i32_0 : i32, i32
  }
}

</mosaic_0001>

<llo_original>
// kernel: residual_block.1
$region0: #{residual_block.1}
  #allocation0 [shape = 'u32[]', space=smem, size = 0x4, offset = 0x4, fixed_abs, tag = 'smem constant byte address 0x4 - core index']
  #allocation1 [shape = 'u32[72,128]{1,0:T(1,128)}', space=vmem, size = 0x9000, scoped, tag = 'internal scratch']
  %s0 = inlined_call_operand.vmem [shape: f32[16,128], index: 0, kind: input, shape index: {}]
  %s1 = inlined_call_operand.vmem [shape: f32[3,128,128], index: 1, kind: input, shape index: {}]
  %s2 = inlined_call_operand.hbm [shape: f32[3,128,128], index: 2, kind: input, shape index: {}]
  %s3 = inlined_call_operand.vmem [shape: f32[3,128], index: 3, kind: input, shape index: {}]
  %s4 = inlined_call_operand.vmem [shape: f32[16,128], index: 4, kind: output, shape index: {}]
  %s5 = sld [smem:[#allocation0]]
  $region30: #{residual_block.1} parent=0
    _
  %s7 = ssub.s32 1, %s5
  %s8 = scalar_select 0, %s7, %s5
  $region1: #{residual_block.1} parent=0
    #allocation2 [shape = 'u8[196608]{0}', space=vmem, size = 0x30000, scoped, tag = 'input window, operand 2, single buffered']
    #allocation3 [shape = 's32[1]{0}', space=sflag, size = 0x4, scoped, tag = 'scoped memory for residual_block.1']
    %9 = vsyncpa [#allocation3], 0
    // Predicated region
    $region2: #{residual_block.1} parent=1 // pred_check
      _
    $region3: #{residual_block.1} parent=1 // pred_check_branch
      %11 = sbr.rel (0) target = $region5
    $region4: #{residual_block.1} parent=1 // pred_region
      _
    $region5: #{residual_block.1} parent=1 // pred_fallthru
      _
    // Predicated region
    $region6: #{residual_block.1} parent=1 // pred_check
      _
    $region7: #{residual_block.1} parent=1 // pred_check_branch
      %13 = sbr.rel (0) target = $region9
    $region8: #{residual_block.1} parent=1 // pred_region
      _
    $region9: #{residual_block.1} parent=1 // pred_fallthru
      _
    // Predicated region
    $region10: #{residual_block.1} parent=1 // pred_check
      _
    $region11: #{residual_block.1} parent=1 // pred_check_branch
      %15 = sbr.rel (0) target = $region13
    $region12: #{residual_block.1} parent=1 // pred_region
      %17 = vsyncadd [#allocation3], 0
      %s18 = sshll.u32 %s2, 4
      %s19 = int_to_ptr.hbm [resolvable:$true] %s18
      %s20 = sshll.u32 [#allocation2], 4
      %s21 = int_to_ptr.vmem [resolvable:$true] %s20
      %26 = dma.hbm_to_vmem [thread:$0]  %s19, 6144, %s21, [#allocation3], 128, 128, 8
    $region13: #{residual_block.1} parent=1 // pred_fallthru
      _
    // Predicated region
    $region14: #{residual_block.1} parent=1 // pred_check
      _
    $region15: #{residual_block.1} parent=1 // pred_check_branch
      %28 = sbr.rel (0) target = $region17
    $region16: #{residual_block.1} parent=1 // pred_region
      _
    $region17: #{residual_block.1} parent=1 // pred_fallthru
      _
    // Predicated region
    $region18: #{residual_block.1} parent=1 // pred_check
      _
    $region19: #{residual_block.1} parent=1 // pred_check_branch
      %30 = sbr.rel (0) target = $region21
    $region20: #{residual_block.1} parent=1 // pred_region
      %32 = dma.done [#allocation3], 6144
    $region21: #{residual_block.1} parent=1 // pred_fallthru
      _
    %v33 = vld [vmem:[%s0] sm:$0xff]
    %v34 = vld [vmem:[%s0 + $0x8] sm:$0xff]
    %v35 = vld [vmem:[%s3] sm:$0x1]
    %v36 = vld [vmem:[%s3 + $0x1] sm:$0x1]
    %v37 = vld [vmem:[%s3 + $0x2] sm:$0x1]
    %v38 = vlaneseq
    %v39 = vshrl.u32 %v38, 7
    %v40 = vadd.s32 %v39, 8
    %vm41 = vcmp.gt.s32.totalorder %v39, 0
    %vm42 = vcmp.gt.s32.totalorder %v40, 0
    %vm43 = vcmp.lt.s32.totalorder %v39, 15
    %vm44 = vcmp.lt.s32.totalorder %v40, 15
    %v45 = vrot.slane %v33, 7
    %v46 = vrot.slane %v34, 7
    %vm47 = vcmp.lt.s32.totalorder %v39, 1
    %v48 = vsel %vm47, %v45, %v46
    %v49 = vsel %vm47, %v46, %v45
    %v50 = vsel %vm41, %v49, 0.0
    %v51 = vsel %vm42, %v48, 0.0
    %v52 = vrot.slane %v33, 1
    %v53 = vrot.slane %v34, 1
    %vm54 = vcmp.lt.s32.totalorder %v39, 7
    %v55 = vsel %vm54, %v52, %v53
    %v56 = vsel %vm54, %v53, %v52
    %v57 = vsel %vm43, %v55, 0.0
    %v58 = vsel %vm44, %v56, 0.0
    %v59 = vld [vmem:[%s1] sm:$0xff]
    %v60 = vld [vmem:[%s1 + $0x8] sm:$0xff]
    %v61 = vld [vmem:[%s1 + $0x10] sm:$0xff]
    %v62 = vld [vmem:[%s1 + $0x18] sm:$0xff]
    %v63 = vld [vmem:[%s1 + $0x20] sm:$0xff]
    %v64 = vld [vmem:[%s1 + $0x28] sm:$0xff]
    %v65 = vld [vmem:[%s1 + $0x30] sm:$0xff]
    %v66 = vld [vmem:[%s1 + $0x38] sm:$0xff]
    %v67 = vld [vmem:[%s1 + $0x40] sm:$0xff]
    %v68 = vld [vmem:[%s1 + $0x48] sm:$0xff]
    %v69 = vld [vmem:[%s1 + $0x50] sm:$0xff]
    %v70 = vld [vmem:[%s1 + $0x58] sm:$0xff]
    %v71 = vld [vmem:[%s1 + $0x60] sm:$0xff]
    %v72 = vld [vmem:[%s1 + $0x68] sm:$0xff]
    %v73 = vld [vmem:[%s1 + $0x70] sm:$0xff]
    %v74 = vld [vmem:[%s1 + $0x78] sm:$0xff]
    %s75 = scalar_lea.vmem %s1, 128
    %v76 = vld [vmem:[%s75] sm:$0xff]
    %v77 = vld [vmem:[%s75 + $0x8] sm:$0xff]
    %v78 = vld [vmem:[%s75 + $0x10] sm:$0xff]
    %v79 = vld [vmem:[%s75 + $0x18] sm:$0xff]
    %v80 = vld [vmem:[%s75 + $0x20] sm:$0xff]
    %v81 = vld [vmem:[%s75 + $0x28] sm:$0xff]
    %v82 = vld [vmem:[%s75 + $0x30] sm:$0xff]
    %v83 = vld [vmem:[%s75 + $0x38] sm:$0xff]
    %v84 = vld [vmem:[%s75 + $0x40] sm:$0xff]
    %v85 = vld [vmem:[%s75 + $0x48] sm:$0xff]
    %v86 = vld [vmem:[%s75 + $0x50] sm:$0xff]
    %v87 = vld [vmem:[%s75 + $0x58] sm:$0xff]
    %v88 = vld [vmem:[%s75 + $0x60] sm:$0xff]
    %v89 = vld [vmem:[%s75 + $0x68] sm:$0xff]
    %v90 = vld [vmem:[%s75 + $0x70] sm:$0xff]
    %v91 = vld [vmem:[%s75 + $0x78] sm:$0xff]
    %92 = vmatpush.msra.mxu0 %v91
    %93 = vmatpush.msra.mxu0 %v90
    %94 = vmatpush.msra.mxu0 %v89
    %95 = vmatpush.msra.mxu0 %v88
    %96 = vmatpush.msra.mxu0 %v87
    %97 = vmatpush.msra.mxu0 %v86
    %98 = vmatpush.msra.mxu0 %v85
    %99 = vmatpush.msra.mxu0 %v84
    %100 = vmatpush.msra.mxu0 %v83
    %101 = vmatpush.msra.mxu0 %v82
    %102 = vmatpush.msra.mxu0 %v81
    %103 = vmatpush.msra.mxu0 %v80
    %104 = vmatpush.msra.mxu0 %v79
    %105 = vmatpush.msra.mxu0 %v78
    %106 = vmatpush.msra.mxu0 %v77
    %107 = vmatpush.msra.mxu0 %v76
    %108 = vmatmul.f32.gmra.mxu0 %v33
    %v109 = vpop.f32.mrf.mxu0
    %v110 = vadd.f32 0.0, %v109
    %111 = vmatmul.f32.gmra.mxu0 %v34
    %v112 = vpop.f32.mrf.mxu0
    %v113 = vadd.f32 0.0, %v112
    %114 = vdwg.mxu0
    %115 = vmatpush.msra.mxu0 %v74
    %116 = vmatpush.msra.mxu0 %v73
    %117 = vmatpush.msra.mxu0 %v72
    %118 = vmatpush.msra.mxu0 %v71
    %119 = vmatpush.msra.mxu0 %v70
    %120 = vmatpush.msra.mxu0 %v69
    %121 = vmatpush.msra.mxu0 %v68
    %122 = vmatpush.msra.mxu0 %v67
    %123 = vmatpush.msra.mxu0 %v66
    %124 = vmatpush.msra.mxu0 %v65
    %125 = vmatpush.msra.mxu0 %v64
    %126 = vmatpush.msra.mxu0 %v63
    %127 = vmatpush.msra.mxu0 %v62
    %128 = vmatpush.msra.mxu0 %v61
    %129 = vmatpush.msra.mxu0 %v60
    %130 = vmatpush.msra.mxu0 %v59
    %131 = vmatmul.f32.gmra.mxu0 %v50
    %v132 = vpop.f32.mrf.mxu0
    %v133 = vadd.f32 %v110, %v132
    %134 = vmatmul.f32.gmra.mxu0 %v51
    %v135 = vpop.f32.mrf.mxu0
    %v136 = vadd.f32 %v113, %v135
    %137 = vdwg.mxu0
    %s138 = scalar_lea.vmem %s1, 256
    %v139 = vld [vmem:[%s138] sm:$0xff]
    %v140 = vld [vmem:[%s138 + $0x8] sm:$0xff]
    %v141 = vld [vmem:[%s138 + $0x10] sm:$0xff]
    %v142 = vld [vmem:[%s138 + $0x18] sm:$0xff]
    %v143 = vld [vmem:[%s138 + $0x20] sm:$0xff]
    %v144 = vld [vmem:[%s138 + $0x28] sm:$0xff]
    %v145 = vld [vmem:[%s138 + $0x30] sm:$0xff]
    %v146 = vld [vmem:[%s138 + $0x38] sm:$0xff]
    %v147 = vld [vmem:[%s138 + $0x40] sm:$0xff]
    %v148 = vld [vmem:[%s138 + $0x48] sm:$0xff]
    %v149 = vld [vmem:[%s138 + $0x50] sm:$0xff]
    %v150 = vld [vmem:[%s138 + $0x58] sm:$0xff]
    %v151 = vld [vmem:[%s138 + $0x60] sm:$0xff]
    %v152 = vld [vmem:[%s138 + $0x68] sm:$0xff]
    %v153 = vld [vmem:[%s138 + $0x70] sm:$0xff]
    %v154 = vld [vmem:[%s138 + $0x78] sm:$0xff]
    %155 = vmatpush.msra.mxu0 %v154
    %156 = vmatpush.msra.mxu0 %v153
    %157 = vmatpush.msra.mxu0 %v152
    %158 = vmatpush.msra.mxu0 %v151
    %159 = vmatpush.msra.mxu0 %v150
    %160 = vmatpush.msra.mxu0 %v149
    %161 = vmatpush.msra.mxu0 %v148
    %162 = vmatpush.msra.mxu0 %v147
    %163 = vmatpush.msra.mxu0 %v146
    %164 = vmatpush.msra.mxu0 %v145
    %165 = vmatpush.msra.mxu0 %v144
    %166 = vmatpush.msra.mxu0 %v143
    %167 = vmatpush.msra.mxu0 %v142
    %168 = vmatpush.msra.mxu0 %v141
    %169 = vmatpush.msra.mxu0 %v140
    %170 = vmatpush.msra.mxu0 %v139
    %171 = vmatmul.f32.gmra.mxu0 %v57
    %v172 = vpop.f32.mrf.mxu0
    %v173 = vadd.f32 0.0, %v172
    %174 = vmatmul.f32.gmra.mxu0 %v58
    %v175 = vpop.f32.mrf.mxu0
    %v176 = vadd.f32 0.0, %v175
    %177 = vdwg.mxu0
    %v178 = vadd.f32 %v133, %v173
    %v179 = vadd.f32 %v136, %v176
    %v180 = vperm.slane %v35, 0
    %v181 = vadd.f32 %v178, %v180
    %v182 = vadd.f32 %v179, %v180
    %vm183 = vcmp.ge.f32.partialorder %v181, 0.0
    %vm184 = vcmp.ge.f32.partialorder %v182, 0.0
    %v185 = vperm.slane %v36, 0
    %v186 = vmul.f32 %v185, %v181
    %v187 = vmul.f32 %v185, %v182
    %v188 = vsel %vm183, %v181, %v186
    %v189 = vsel %vm184, %v182, %v187
    %v190 = vrot.slane %v188, 7
    %v191 = vrot.slane %v189, 7
    %v192 = vsel %vm47, %v190, %v191
    %v193 = vsel %vm47, %v191, %v190
    %v194 = vsel %vm41, %v193, 0.0
    %v195 = vsel %vm42, %v192, 0.0
    %v196 = vrot.slane %v188, 1
    %v197 = vrot.slane %v189, 1
    %v198 = vsel %vm54, %v196, %v197
    %v199 = vsel %vm54, %v197, %v196
    %v200 = vsel %vm43, %v198, 0.0
    %v201 = vsel %vm44, %v199, 0.0
    %v202 = vld [vmem:[#allocation2] sm:$0xff]
    %v203 = vld [vmem:[#allocation2 + $0x8] sm:$0xff]
    %v204 = vld [vmem:[#allocation2 + $0x10] sm:$0xff]
    %v205 = vld [vmem:[#allocation2 + $0x18] sm:$0xff]
    %v206 = vld [vmem:[#allocation2 + $0x20] sm:$0xff]
    %v207 = vld [vmem:[#allocation2 + $0x28] sm:$0xff]
    %v208 = vld [vmem:[#allocation2 + $0x30] sm:$0xff]
    %v209 = vld [vmem:[#allocation2 + $0x38] sm:$0xff]
    %v210 = vld [vmem:[#allocation2 + $0x40] sm:$0xff]
    %v211 = vld [vmem:[#allocation2 + $0x48] sm:$0xff]
    %v212 = vld [vmem:[#allocation2 + $0x50] sm:$0xff]
    %v213 = vld [vmem:[#allocation2 + $0x58] sm:$0xff]
    %v214 = vld [vmem:[#allocation2 + $0x60] sm:$0xff]
    %v215 = vld [vmem:[#allocation2 + $0x68] sm:$0xff]
    %v216 = vld [vmem:[#allocation2 + $0x70] sm:$0xff]
    %v217 = vld [vmem:[#allocation2 + $0x78] sm:$0xff]
    %s218 = scalar_lea.vmem [#allocation2], 128
    %v219 = vld [vmem:[%s218] sm:$0xff]
    %v220 = vld [vmem:[%s218 + $0x8] sm:$0xff]
    %v221 = vld [vmem:[%s218 + $0x10] sm:$0xff]
    %v222 = vld [vmem:[%s218 + $0x18] sm:$0xff]
    %v223 = vld [vmem:[%s218 + $0x20] sm:$0xff]
    %v224 = vld [vmem:[%s218 + $0x28] sm:$0xff]
    %v225 = vld [vmem:[%s218 + $0x30] sm:$0xff]
    %v226 = vld [vmem:[%s218 + $0x38] sm:$0xff]
    %v227 = vld [vmem:[%s218 + $0x40] sm:$0xff]
    %v228 = vld [vmem:[%s218 + $0x48] sm:$0xff]
    %v229 = vld [vmem:[%s218 + $0x50] sm:$0xff]
    %v230 = vld [vmem:[%s218 + $0x58] sm:$0xff]
    %v231 = vld [vmem:[%s218 + $0x60] sm:$0xff]
    %v232 = vld [vmem:[%s218 + $0x68] sm:$0xff]
    %v233 = vld [vmem:[%s218 + $0x70] sm:$0xff]
    %v234 = vld [vmem:[%s218 + $0x78] sm:$0xff]
    %235 = vmatpush.msra.mxu0 %v234
    %236 = vmatpush.msra.mxu0 %v233
    %237 = vmatpush.msra.mxu0 %v232
    %238 = vmatpush.msra.mxu0 %v231
    %239 = vmatpush.msra.mxu0 %v230
    %240 = vmatpush.msra.mxu0 %v229
    %241 = vmatpush.msra.mxu0 %v228
    %242 = vmatpush.msra.mxu0 %v227
    %243 = vmatpush.msra.mxu0 %v226
    %244 = vmatpush.msra.mxu0 %v225
    %245 = vmatpush.msra.mxu0 %v224
    %246 = vmatpush.msra.mxu0 %v223
    %247 = vmatpush.msra.mxu0 %v222
    %248 = vmatpush.msra.mxu0 %v221
    %249 = vmatpush.msra.mxu0 %v220
    %250 = vmatpush.msra.mxu0 %v219
    %251 = vmatmul.f32.gmra.mxu0 %v188
    %v252 = vpop.f32.mrf.mxu0
    %v253 = vadd.f32 0.0, %v252
    %254 = vmatmul.f32.gmra.mxu0 %v189
    %v255 = vpop.f32.mrf.mxu0
    %v256 = vadd.f32 0.0, %v255
    %257 = vdwg.mxu0
    %258 = vmatpush.msra.mxu0 %v217
    %259 = vmatpush.msra.mxu0 %v216
    %260 = vmatpush.msra.mxu0 %v215
    %261 = vmatpush.msra.mxu0 %v214
    %262 = vmatpush.msra.mxu0 %v213
    %263 = vmatpush.msra.mxu0 %v212
    %264 = vmatpush.msra.mxu0 %v211
    %265 = vmatpush.msra.mxu0 %v210
    %266 = vmatpush.msra.mxu0 %v209
    %267 = vmatpush.msra.mxu0 %v208
    %268 = vmatpush.msra.mxu0 %v207
    %269 = vmatpush.msra.mxu0 %v206
    %270 = vmatpush.msra.mxu0 %v205
    %271 = vmatpush.msra.mxu0 %v204
    %272 = vmatpush.msra.mxu0 %v203
    %273 = vmatpush.msra.mxu0 %v202
    %274 = vmatmul.f32.gmra.mxu0 %v194
    %v275 = vpop.f32.mrf.mxu0
    %v276 = vadd.f32 %v253, %v275
    %277 = vmatmul.f32.gmra.mxu0 %v195
    %v278 = vpop.f32.mrf.mxu0
    %v279 = vadd.f32 %v256, %v278
    %280 = vdwg.mxu0
    %s281 = scalar_lea.vmem [#allocation2], 256
    %v282 = vld [vmem:[%s281] sm:$0xff]
    %v283 = vld [vmem:[%s281 + $0x8] sm:$0xff]
    %v284 = vld [vmem:[%s281 + $0x10] sm:$0xff]
    %v285 = vld [vmem:[%s281 + $0x18] sm:$0xff]
    %v286 = vld [vmem:[%s281 + $0x20] sm:$0xff]
    %v287 = vld [vmem:[%s281 + $0x28] sm:$0xff]
    %v288 = vld [vmem:[%s281 + $0x30] sm:$0xff]
    %v289 = vld [vmem:[%s281 + $0x38] sm:$0xff]
    %v290 = vld [vmem:[%s281 + $0x40] sm:$0xff]
    %v291 = vld [vmem:[%s281 + $0x48] sm:$0xff]
    %v292 = vld [vmem:[%s281 + $0x50] sm:$0xff]
    %v293 = vld [vmem:[%s281 + $0x58] sm:$0xff]
    %v294 = vld [vmem:[%s281 + $0x60] sm:$0xff]
    %v295 = vld [vmem:[%s281 + $0x68] sm:$0xff]
    %v296 = vld [vmem:[%s281 + $0x70] sm:$0xff]
    %v297 = vld [vmem:[%s281 + $0x78] sm:$0xff]
    %298 = vmatpush.msra.mxu0 %v297
    %299 = vmatpush.msra.mxu0 %v296
    %300 = vmatpush.msra.mxu0 %v295
    %301 = vmatpush.msra.mxu0 %v294
    %302 = vmatpush.msra.mxu0 %v293
    %303 = vmatpush.msra.mxu0 %v292
    %304 = vmatpush.msra.mxu0 %v291
    %305 = vmatpush.msra.mxu0 %v290
    %306 = vmatpush.msra.mxu0 %v289
    %307 = vmatpush.msra.mxu0 %v288
    %308 = vmatpush.msra.mxu0 %v287
    %309 = vmatpush.msra.mxu0 %v286
    %310 = vmatpush.msra.mxu0 %v285
    %311 = vmatpush.msra.mxu0 %v284
    %312 = vmatpush.msra.mxu0 %v283
    %313 = vmatpush.msra.mxu0 %v282
    %314 = vmatmul.f32.gmra.mxu0 %v200
    %v315 = vpop.f32.mrf.mxu0
    %v316 = vadd.f32 0.0, %v315
    %317 = vmatmul.f32.gmra.mxu0 %v201
    %v318 = vpop.f32.mrf.mxu0
    %v319 = vadd.f32 0.0, %v318
    %320 = vdwg.mxu0
    %v321 = vadd.f32 %v276, %v316
    %v322 = vadd.f32 %v279, %v319
    %v323 = vperm.slane %v37, 0
    %v324 = vadd.f32 %v321, %v323
    %v325 = vadd.f32 %v322, %v323
    %v326 = vadd.f32 %v324, %v33
    %v327 = vadd.f32 %v325, %v34
    %328 = vst [vmem:[%s4] sm:$0xff] %v326
    %329 = vst [vmem:[%s4 + $0x8] sm:$0xff] %v327
    // Predicated region
    $region22: #{residual_block.1} parent=1 // pred_check
      _
    $region23: #{residual_block.1} parent=1 // pred_check_branch
      %331 = sbr.rel (0) target = $region25
    $region24: #{residual_block.1} parent=1 // pred_region
      _
    $region25: #{residual_block.1} parent=1 // pred_fallthru
      _
    // Predicated region
    $region26: #{residual_block.1} parent=1 // pred_check
      _
    $region27: #{residual_block.1} parent=1 // pred_check_branch
      %333 = sbr.rel (0) target = $region29
    $region28: #{residual_block.1} parent=1 // pred_region
      _
    $region29: #{residual_block.1} parent=1 // pred_fallthru
      _
    %334 = vsyncpa [#allocation3], 1

</llo_original>
